<compile_context>
chip_gen: v7x
topology: tpu7x:2x2x1
jax: 0.10.0
libtpu: 0.0.40
codegen_flags: <defaults>
</compile_context>

<pallas_src>
import functools

import jax
import jax.numpy as jnp
from jax.experimental import pallas as pl
from jax.experimental.pallas import tpu as pltpu


def _sls_kernel(xe_ref, aux_ref, ra_ref, rx_ref, wbig_ref, bpred_ref, out_ref, *, n_aux):
    """One batch tile: out = rowwise_kron(aux_aug, gate*xe) @ Wbig + b_pred."""
    # gate = original aux_in[:, -1]; aux_ref carries a trailing ones column,
    # so the gate lives at column n_aux - 1.
    gate = aux_ref[:, n_aux - 1:n_aux]                                   # (TB, 1)
    xeg = xe_ref[...] * gate                                             # (TB, n_in+1)

    # Row-wise Kronecker product built on the MXU via constant 0/1 selection matrices:
    #   aux_rep[b, j] = aux_aug[b, j // n_slots]
    #   xe_tile[b, j] = xeg[b, j % n_slots]
    aux_rep = jnp.dot(aux_ref[...], ra_ref[...],
                      preferred_element_type=jnp.float32)                # (TB, kdim)
    xe_tile = jnp.dot(xeg, rx_ref[...],
                      preferred_element_type=jnp.float32)                # (TB, kdim)

    # Single fused contraction: K = (n_aux+1)*(n_in+1), N = n_out padded to 128 lanes.
    out = jnp.dot(aux_rep * xe_tile, wbig_ref[...],
                  preferred_element_type=jnp.float32) + bpred_ref[...]
    out_ref[...] = out.astype(out_ref.dtype)                             # lane-dense store


def sls_forward(inputs, aux_in, w_aux, b_aux, w_pred, b_pred, *, tb=1024):
    """Fused SLS forward. w_aux is (n_aux, n_hidden*(n_in+1)); w_pred is (n_hidden, n_out)."""
    B, n_in = inputs.shape
    _, n_aux = aux_in.shape
    n_hidden, n_out = w_pred.shape
    n_slots = n_in + 1
    hw = n_hidden * n_slots
    assert w_aux.shape == (n_aux, hw)
    kdim = (n_aux + 1) * n_slots

    # ---- wrapper-side layout / weight prep (one-time, structural & weight-only) ----
    f32 = jnp.float32
    ones = jnp.ones((B, 1), f32)
    xe = jnp.concatenate([inputs.astype(f32), ones], axis=1)              # (B, n_in+1)
    aux_aug = jnp.concatenate([aux_in.astype(f32), ones], axis=1)         # (B, n_aux+1)
    waux_aug = jnp.concatenate([w_aux.astype(f32),
                                b_aux.reshape(1, hw).astype(f32)], axis=0)  # (n_aux+1, hw)

    # Lane-dense output: pad n_out to a multiple of 128 (stripped after the call).
    n_out_p = ((n_out + 127) // 128) * 128
    wpred_p = jnp.zeros((n_hidden, n_out_p), f32).at[:, :n_out].set(w_pred.astype(f32))
    bpred_p = jnp.zeros((1, n_out_p), f32).at[:, :n_out].set(
        b_pred.reshape(1, n_out).astype(f32))

    # Weight-only fold of the aux network and the prediction head:
    #   Wbig[a*n_slots + s, o] = sum_h waux_aug[a, s*n_hidden + h] * w_pred[h, o]
    wbig = jnp.einsum('ash,ho->aso',
                      waux_aug.reshape(n_aux + 1, n_slots, n_hidden),
                      wpred_p).reshape(kdim, n_out_p)                     # (kdim, n_out_p)

    # Constant 0/1 selection matrices for the MXU-based row-wise Kronecker.
    j = jnp.arange(kdim)
    ra_mat = (j[None, :] // n_slots ==
              jnp.arange(n_aux + 1)[:, None]).astype(f32)                 # (n_aux+1, kdim)
    rx_mat = (j[None, :] % n_slots ==
              jnp.arange(n_slots)[:, None]).astype(f32)                   # (n_slots, kdim)

    # ---- batch tiling ----
    # Large tiles amortize per-grid-step overhead and fill MXU rows, but keep at least
    # two tiles whenever possible so the "parallel" axis shards across v7x's 2 TensorCores.
    bmin = ((B + 7) // 8) * 8
    half = (((bmin + 1) // 2 + 7) // 8) * 8
    tb = max(8, min(tb, half))
    bp = ((B + tb - 1) // tb) * tb
    if bp != B:
        xe = jnp.pad(xe, ((0, bp - B), (0, 0)))
        aux_aug = jnp.pad(aux_aug, ((0, bp - B), (0, 0)))

    # ---- explicit VMEM budget (sized against v7x's 64 MiB physical / 32 MiB scoped) ----
    def _lane(n):
        return ((n + 127) // 128) * 128
    vmem_budget = 4 * (
        2 * tb * (_lane(n_slots) + _lane(n_aux + 1) + n_out_p)            # double-buffered I/O
        + 2 * (_lane(kdim) * (n_aux + 1 + n_slots) + kdim * n_out_p + 8 * n_out_p)  # constants
        + 3 * tb * _lane(kdim))                                           # in-kernel temporaries
    vmem_limit = int(min(max(4 * vmem_budget, 16 * 1024 * 1024), 32 * 1024 * 1024))

    kernel = functools.partial(_sls_kernel, n_aux=n_aux)
    out = pl.pallas_call(
        kernel,
        out_shape=jax.ShapeDtypeStruct((bp, n_out_p), f32),
        grid=(bp // tb,),
        in_specs=[
            pl.BlockSpec((tb, n_slots), lambda b: (b, 0)),                # xe
            pl.BlockSpec((tb, n_aux + 1), lambda b: (b, 0)),              # aux (augmented)
            pl.BlockSpec((n_aux + 1, kdim), lambda b: (0, 0)),            # RA    (fetched once)
            pl.BlockSpec((n_slots, kdim), lambda b: (0, 0)),              # RX    (fetched once)
            pl.BlockSpec((kdim, n_out_p), lambda b: (0, 0)),              # Wbig  (fetched once)
            pl.BlockSpec((1, n_out_p), lambda b: (0, 0)),                 # b_pred(fetched once)
        ],
        out_specs=pl.BlockSpec((tb, n_out_p), lambda b: (b, 0)),
        compiler_params=pltpu.CompilerParams(
            dimension_semantics=("parallel",),
            vmem_limit_bytes=vmem_limit),
    )(xe, aux_aug, ra_mat, rx_mat, wbig, bpred_p)

    # Padded rows hold b_pred (harmless); sliced off here.
    return out[:B, :n_out]


def reference_forward(inputs, aux_in, w_aux, b_aux, w_pred, b_pred):
    """Pure-JAX reference with identical semantics."""
    B, n_in = inputs.shape
    n_hidden, _ = w_pred.shape
    W = aux_in @ w_aux + b_aux                                            # (B, n_hidden*(n_in+1))
    W3 = W.reshape(B, n_in + 1, n_hidden)
    H = jnp.einsum('bi,bih->bh', inputs, W3[:, :n_in, :]) + W3[:, n_in, :]
    H = H * aux_in[:, -1:]
    return H @ w_pred + b_pred


if __name__ == "__main__":
    # Small shapes consistent with the module's forward:
    # n_in = 15 -> 16 slots -> hw = 512; B = 200 exercises batch tiling (2 tiles) + padding.
    B, n_aux, n_in, n_hidden, n_out = 200, 8, 15, 32, 4
    hw = n_hidden * (n_in + 1)

    key = jax.random.PRNGKey(0)
    k = jax.random.split(key, 6)
    inputs = jax.random.normal(k[0], (B, n_in), jnp.float32)
    aux_in = jax.random.normal(k[1], (B, n_aux), jnp.float32)
    # nn.Linear-style uniform init, weights pre-transposed so the math is x @ W.
    w_aux = jax.random.uniform(k[2], (n_aux, hw), jnp.float32,
                               -1.0 / n_aux**0.5, 1.0 / n_aux**0.5)
    b_aux = jax.random.uniform(k[3], (1, hw), jnp.float32,
                               -1.0 / n_aux**0.5, 1.0 / n_aux**0.5)
    w_pred = jax.random.uniform(k[4], (n_hidden, n_out), jnp.float32,
                                -1.0 / n_hidden**0.5, 1.0 / n_hidden**0.5)
    b_pred = jax.random.uniform(k[5], (1, n_out), jnp.float32,
                                -1.0 / n_hidden**0.5, 1.0 / n_hidden**0.5)

    out = sls_forward(inputs, aux_in, w_aux, b_aux, w_pred, b_pred)
    jax.block_until_ready(out)

    ref = reference_forward(inputs, aux_in, w_aux, b_aux, w_pred, b_pred)
    assert out.shape == (B, n_out)
    max_err = float(jnp.max(jnp.abs(out - ref)))
    assert jnp.allclose(out, ref, atol=5e-4, rtol=5e-4), f"mismatch vs reference, max err {max_err}"
    print("KERNEL_OK")
</pallas_src>

<mosaic_0001>
module attributes {stable_mosaic.version = 11 : i64} {
  func.func @_sls_kernel(%arg0: i32, %arg1: memref<104x16xf32, #tpu.memory_space<vmem>>, %arg2: memref<104x9xf32, #tpu.memory_space<vmem>>, %arg3: memref<9x144xf32, #tpu.memory_space<vmem>>, %arg4: memref<16x144xf32, #tpu.memory_space<vmem>>, %arg5: memref<144x128xf32, #tpu.memory_space<vmem>>, %arg6: memref<1x128xf32, #tpu.memory_space<vmem>>, %arg7: memref<104x128xf32, #tpu.memory_space<vmem>>) attributes {dimension_semantics = [#tpu.dimension_semantics<parallel>], iteration_bounds = array<i64: 2>, scalar_prefetch = 0 : i64, scratch_operands = 0 : i64, tpu.core_type = #tpu.core_type<tc>, window_params = [{transform_indices = @transform_0, window_bounds = array<i64: 104, 16>}, {transform_indices = @transform_1, window_bounds = array<i64: 104, 9>}, {pipeline_mode = #tpu.pipeline_mode<synchronous>, transform_indices = @transform_2, window_bounds = array<i64: 9, 144>}, {pipeline_mode = #tpu.pipeline_mode<synchronous>, transform_indices = @transform_3, window_bounds = array<i64: 16, 144>}, {pipeline_mode = #tpu.pipeline_mode<synchronous>, transform_indices = @transform_4, window_bounds = array<i64: 144, 128>}, {pipeline_mode = #tpu.pipeline_mode<synchronous>, transform_indices = @transform_5, window_bounds = array<i64: 1, 128>}, {transform_indices = @transform_6, window_bounds = array<i64: 104, 128>}]} {
    %c0 = arith.constant 0 : index
    %c7 = arith.constant 7 : index
    %0 = vector.load %arg2[%c0, %c7] : memref<104x9xf32, #tpu.memory_space<vmem>>, vector<104x1xf32>
    %c0_0 = arith.constant 0 : index
    %c0_1 = arith.constant 0 : index
    %1 = vector.load %arg1[%c0_0, %c0_1] : memref<104x16xf32, #tpu.memory_space<vmem>>, vector<104x16xf32>
    %2 = vector.broadcast %0 : vector<104x1xf32> to vector<104x16xf32>
    %3 = arith.mulf %1, %2 : vector<104x16xf32>
    %c0_2 = arith.constant 0 : index
    %c0_3 = arith.constant 0 : index
    %4 = vector.load %arg2[%c0_2, %c0_3] : memref<104x9xf32, #tpu.memory_space<vmem>>, vector<104x9xf32>
    %c0_4 = arith.constant 0 : index
    %c0_5 = arith.constant 0 : index
    %5 = vector.load %arg3[%c0_4, %c0_5] : memref<9x144xf32, #tpu.memory_space<vmem>>, vector<9x144xf32>
    %cst = arith.constant dense<0.000000e+00> : vector<104x144xf32>
    %6 = tpu.matmul %4, %5, %cst {dimension_numbers = #tpu.dot_dimension_numbers<[1], [0], [0], [1], [0, 0, 1, 1], [], []>} : vector<104x9xf32>, vector<9x144xf32>, vector<104x144xf32> -> vector<104x144xf32>
    %c0_6 = arith.constant 0 : index
    %c0_7 = arith.constant 0 : index
    %7 = vector.load %arg4[%c0_6, %c0_7] : memref<16x144xf32, #tpu.memory_space<vmem>>, vector<16x144xf32>
    %cst_8 = arith.constant dense<0.000000e+00> : vector<104x144xf32>
    %8 = tpu.matmul %3, %7, %cst_8 {dimension_numbers = #tpu.dot_dimension_numbers<[1], [0], [0], [1], [0, 0, 1, 1], [], []>} : vector<104x16xf32>, vector<16x144xf32>, vector<104x144xf32> -> vector<104x144xf32>
    %9 = arith.mulf %6, %8 : vector<104x144xf32>
    %c0_9 = arith.constant 0 : index
    %c0_10 = arith.constant 0 : index
    %10 = vector.load %arg5[%c0_9, %c0_10] : memref<144x128xf32, #tpu.memory_space<vmem>>, vector<144x128xf32>
    %cst_11 = arith.constant dense<0.000000e+00> : vector<104x128xf32>
    %11 = tpu.matmul %9, %10, %cst_11 {dimension_numbers = #tpu.dot_dimension_numbers<[1], [0], [0], [1], [0, 0, 1, 1], [], []>} : vector<104x144xf32>, vector<144x128xf32>, vector<104x128xf32> -> vector<104x128xf32>
    %c0_12 = arith.constant 0 : index
    %c0_13 = arith.constant 0 : index
    %12 = vector.load %arg6[%c0_12, %c0_13] : memref<1x128xf32, #tpu.memory_space<vmem>>, vector<1x128xf32>
    %13 = vector.broadcast %12 : vector<1x128xf32> to vector<104x128xf32>
    %14 = arith.addf %11, %13 : vector<104x128xf32>
    %c0_14 = arith.constant 0 : index
    %c0_15 = arith.constant 0 : index
    %15 = vector.load %arg7[%c0_14, %c0_15] : memref<104x128xf32, #tpu.memory_space<vmem>>, vector<104x128xf32>
    tpu.vector_store %arg7[%c0_14, %c0_15], %14 {strides = array<i32>} : memref<104x128xf32, #tpu.memory_space<vmem>>, vector<104x128xf32>,
    return
  }
  func.func @transform_0(%arg0: i32) -> (i32, i32) {
    %c0_i32 = arith.constant 0 : i32
    %c0_i32_0 = arith.constant 0 : i32
    return %arg0, %c0_i32 : i32, i32
  }
  func.func @transform_1(%arg0: i32) -> (i32, i32) {
    %c0_i32 = arith.constant 0 : i32
    %c0_i32_0 = arith.constant 0 : i32
    return %arg0, %c0_i32 : i32, i32
  }
  func.func @transform_2(%arg0: i32) -> (i32, i32) {
    %c0_i32 = arith.constant 0 : i32
    %c0_i32_0 = arith.constant 0 : i32
    %c0_i32_1 = arith.constant 0 : i32
    return %c0_i32, %c0_i32_0 : i32, i32
  }
  func.func @transform_3(%arg0: i32) -> (i32, i32) {
    %c0_i32 = arith.constant 0 : i32
    %c0_i32_0 = arith.constant 0 : i32
    %c0_i32_1 = arith.constant 0 : i32
    return %c0_i32, %c0_i32_0 : i32, i32
  }
  func.func @transform_4(%arg0: i32) -> (i32, i32) {
    %c0_i32 = arith.constant 0 : i32
    %c0_i32_0 = arith.constant 0 : i32
    %c0_i32_1 = arith.constant 0 : i32
    return %c0_i32, %c0_i32_0 : i32, i32
  }
  func.func @transform_5(%arg0: i32) -> (i32, i32) {
    %c0_i32 = arith.constant 0 : i32
    %c0_i32_0 = arith.constant 0 : i32
    %c0_i32_1 = arith.constant 0 : i32
    return %c0_i32, %c0_i32_0 : i32, i32
  }
  func.func @transform_6(%arg0: i32) -> (i32, i32) {
    %c0_i32 = arith.constant 0 : i32
    %c0_i32_0 = arith.constant 0 : i32
    return %arg0, %c0_i32 : i32, i32
  }
}

</mosaic_0001>

<llo_original>
// kernel: tpu_custom_call.1
$region0: #{tpu_custom_call.1}
  #allocation0 [shape = 'u32[]', space=smem, size = 0x4, offset = 0x4, fixed_abs, tag = 'smem constant byte address 0x4 - core index']
  #allocation1 [shape = 'u32[144,128]{1,0:T(1,128)}', space=vmem, size = 0x12000, scoped, tag = 'internal scratch']
  %s0 = inlined_call_operand.vmem [shape: f32[208,16], index: 0, kind: input, shape index: {}]
  %s1 = inlined_call_operand.vmem [shape: f32[208,9], index: 1, kind: input, shape index: {}]
  %s2 = inlined_call_operand.vmem [shape: f32[9,144], index: 2, kind: input, shape index: {}]
  %s3 = inlined_call_operand.vmem [shape: f32[16,144], index: 3, kind: input, shape index: {}]
  %s4 = inlined_call_operand.vmem [shape: f32[144,128], index: 4, kind: input, shape index: {}]
  %s5 = inlined_call_operand.vmem [shape: f32[1,128], index: 5, kind: input, shape index: {}]
  %s6 = inlined_call_operand.hbm [shape: f32[208,128], index: 6, kind: output, shape index: {}]
  %s7 = sld [smem:[#allocation0]]
  $region57: #{tpu_custom_call.1} parent=0
    _
  %s9 = ssub.s32 1, %s7
  %s10 = scalar_select 0, %s9, %s7
  $region1: #{tpu_custom_call.1} parent=0
    #allocation2 [shape = 'u8[106496]{0}', space=vmem, size = 0x1a000, scoped, tag = 'output window, operand 0']
    #allocation3 [shape = 's32[2]{0}', space=sflag, size = 0x8, scoped, tag = 'scoped memory for tpu_custom_call.1']
    %11 = vsyncpa [#allocation3], 0
    %s12 = scalar_lea.sflag [#allocation3], 1
    %13 = vsyncpa %s12, 0
    loop: start=0, step=1, limit=4
    $region2: #{tpu_custom_call.1} parent=1 // loop_pre_header
      _
    $region3: #{tpu_custom_call.1} parent=1 // loop_header
      %s15 = sphi 0, %s19
      %p16 = scmp.ge.s32.totalorder %s15, 4
      %s25 = sphi 0, %s27
      %s28 = sphi 0, %s25
      %s29 = sphi 0, %s28
      %s45 = sphi 0, %s29
      %s51 = sphi 0, %s53
      %s54 = sphi 0, %s51
      %s55 = sphi 0, %s54
      %s71 = sphi 0, %s55
      %s75 = sphi 0, %s75
      %s77 = sphi 0, %s75
      %s78 = sphi 0, %s77
      %s92 = sphi 0, %s78
      %s96 = sphi 0, %s96
      %s98 = sphi 0, %s96
      %s99 = sphi 0, %s98
      %s113 = sphi 0, %s99
      %s117 = sphi 0, %s117
      %s119 = sphi 0, %s117
      %s120 = sphi 0, %s119
      %s134 = sphi 0, %s120
      %s138 = sphi 0, %s138
      %s140 = sphi 0, %s138
      %s141 = sphi 0, %s140
      %s155 = sphi 0, %s141
      %s161 = sphi 0, %s163
      %s164 = sphi 0, %s161
      %s165 = sphi 0, %s164
      %s181 = sphi 0, %s165
    $region4: #{tpu_custom_call.1} parent=1 // loop_header_branch
      %18 = sbr.rel (%p16) target = $region8
    $region5: #{tpu_custom_call.1} parent=1 // loop_body
      %s20 = ssub.s32 %s15, 1
      %s21 = ssub.s32 %s15, 2
      %s22 = sadd.s32 %s15, 1
      %s23 = ssub.s32 %s15, %s22
      %p24 = scmp.eq.s32.totalorder %s23, 0
      %s26 = sadd.s32 %s25, 1
      %s27 = scalar_select %p24, %s25, %s26
      %p30 = pneg %p24
      %p31 = scmp.eq.s32.totalorder %s15, 1
      %p32 = por %p30, %p31
      %p33 = scmp.ne.s32.totalorder %s25, %s28
      %p34 = scmp.eq.s32.totalorder %s15, 0
      %p35 = por %p33, %p34
      %p36 = scmp.ne.s32.totalorder %s25, %s28
      %p37 = scmp.eq.s32.totalorder %s20, 1
      %p38 = por %p36, %p37
      %p39 = scmp.ne.s32.totalorder %s28, %s29
      %p40 = scmp.eq.s32.totalorder %s20, 0
      %p41 = por %p39, %p40
      %p42 = scmp.ne.s32.totalorder %s28, %s29
      %p43 = scmp.eq.s32.totalorder %s21, 1
      %p44 = por %p42, %p43
      %p46 = scmp.ne.s32.totalorder %s29, %s45
      %p47 = scmp.eq.s32.totalorder %s21, 0
      %p48 = por %p46, %p47
      %s49 = ssub.s32 %s15, %s22
      %p50 = scmp.eq.s32.totalorder %s49, 0
      %s52 = sadd.s32 %s51, 1
      %s53 = scalar_select %p50, %s51, %s52
      %p56 = pneg %p50
      %p57 = scmp.eq.s32.totalorder %s15, 1
      %p58 = por %p56, %p57
      %p59 = scmp.ne.s32.totalorder %s51, %s54
      %p60 = scmp.eq.s32.totalorder %s15, 0
      %p61 = por %p59, %p60
      %p62 = scmp.ne.s32.totalorder %s51, %s54
      %p63 = scmp.eq.s32.totalorder %s20, 1
      %p64 = por %p62, %p63
      %p65 = scmp.ne.s32.totalorder %s54, %s55
      %p66 = scmp.eq.s32.totalorder %s20, 0
      %p67 = por %p65, %p66
      %p68 = scmp.ne.s32.totalorder %s54, %s55
      %p69 = scmp.eq.s32.totalorder %s21, 1
      %p70 = por %p68, %p69
      %p72 = scmp.ne.s32.totalorder %s55, %s71
      %p73 = scmp.eq.s32.totalorder %s21, 0
      %p74 = por %p72, %p73
      %s76 = sadd.s32 %s75, 1
      %p79 = scmp.eq.s32.totalorder %s15, 1
      %p80 = scmp.ne.s32.totalorder %s75, %s77
      %p81 = scmp.eq.s32.totalorder %s15, 0
      %p82 = por %p80, %p81
      %p83 = scmp.ne.s32.totalorder %s75, %s77
      %p84 = scmp.eq.s32.totalorder %s20, 1
      %p85 = por %p83, %p84
      %p86 = scmp.ne.s32.totalorder %s77, %s78
      %p87 = scmp.eq.s32.totalorder %s20, 0
      %p88 = por %p86, %p87
      %p89 = scmp.ne.s32.totalorder %s77, %s78
      %p90 = scmp.eq.s32.totalorder %s21, 1
      %p91 = por %p89, %p90
      %p93 = scmp.ne.s32.totalorder %s78, %s92
      %p94 = scmp.eq.s32.totalorder %s21, 0
      %p95 = por %p93, %p94
      %s97 = sadd.s32 %s96, 1
      %p100 = scmp.eq.s32.totalorder %s15, 1
      %p101 = scmp.ne.s32.totalorder %s96, %s98
      %p102 = scmp.eq.s32.totalorder %s15, 0
      %p103 = por %p101, %p102
      %p104 = scmp.ne.s32.totalorder %s96, %s98
      %p105 = scmp.eq.s32.totalorder %s20, 1
      %p106 = por %p104, %p105
      %p107 = scmp.ne.s32.totalorder %s98, %s99
      %p108 = scmp.eq.s32.totalorder %s20, 0
      %p109 = por %p107, %p108
      %p110 = scmp.ne.s32.totalorder %s98, %s99
      %p111 = scmp.eq.s32.totalorder %s21, 1
      %p112 = por %p110, %p111
      %p114 = scmp.ne.s32.totalorder %s99, %s113
      %p115 = scmp.eq.s32.totalorder %s21, 0
      %p116 = por %p114, %p115
      %s118 = sadd.s32 %s117, 1
      %p121 = scmp.eq.s32.totalorder %s15, 1
      %p122 = scmp.ne.s32.totalorder %s117, %s119
      %p123 = scmp.eq.s32.totalorder %s15, 0
      %p124 = por %p122, %p123
      %p125 = scmp.ne.s32.totalorder %s117, %s119
      %p126 = scmp.eq.s32.totalorder %s20, 1
      %p127 = por %p125, %p126
      %p128 = scmp.ne.s32.totalorder %s119, %s120
      %p129 = scmp.eq.s32.totalorder %s20, 0
      %p130 = por %p128, %p129
      %p131 = scmp.ne.s32.totalorder %s119, %s120
      %p132 = scmp.eq.s32.totalorder %s21, 1
      %p133 = por %p131, %p132
      %p135 = scmp.ne.s32.totalorder %s120, %s134
      %p136 = scmp.eq.s32.totalorder %s21, 0
      %p137 = por %p135, %p136
      %s139 = sadd.s32 %s138, 1
      %p142 = scmp.eq.s32.totalorder %s15, 1
      %p143 = scmp.ne.s32.totalorder %s138, %s140
      %p144 = scmp.eq.s32.totalorder %s15, 0
      %p145 = por %p143, %p144
      %p146 = scmp.ne.s32.totalorder %s138, %s140
      %p147 = scmp.eq.s32.totalorder %s20, 1
      %p148 = por %p146, %p147
      %p149 = scmp.ne.s32.totalorder %s140, %s141
      %p150 = scmp.eq.s32.totalorder %s20, 0
      %p151 = por %p149, %p150
      %p152 = scmp.ne.s32.totalorder %s140, %s141
      %p153 = scmp.eq.s32.totalorder %s21, 1
      %p154 = por %p152, %p153
      %p156 = scmp.ne.s32.totalorder %s141, %s155
      %p157 = scmp.eq.s32.totalorder %s21, 0
      %p158 = por %p156, %p157
      %s159 = ssub.s32 %s15, %s22
      %p160 = scmp.eq.s32.totalorder %s159, 0
      %s162 = sadd.s32 %s161, 1
      %s163 = scalar_select %p160, %s161, %s162
      %p166 = pneg %p160
      %p167 = scmp.eq.s32.totalorder %s15, 1
      %p168 = por %p166, %p167
      %p169 = scmp.ne.s32.totalorder %s161, %s164
      %p170 = scmp.eq.s32.totalorder %s15, 0
      %p171 = por %p169, %p170
      %p172 = scmp.ne.s32.totalorder %s161, %s164
      %p173 = scmp.eq.s32.totalorder %s20, 1
      %p174 = por %p172, %p173
      %p175 = scmp.ne.s32.totalorder %s164, %s165
      %p176 = scmp.eq.s32.totalorder %s20, 0
      %p177 = por %p175, %p176
      %p178 = scmp.ne.s32.totalorder %s164, %s165
      %p179 = scmp.eq.s32.totalorder %s21, 1
      %p180 = por %p178, %p179
      %p182 = scmp.ne.s32.totalorder %s165, %s181
      %p183 = scmp.eq.s32.totalorder %s21, 0
      %p184 = por %p182, %p183
      %p185 = scmp.le.s32.totalorder 1, %s15
      %p186 = scmp.lt.s32.totalorder %s15, 3
      %p187 = pnand %p185, %p186
      %p188 = pneg %p187
      // Predicated region
      $region9: #{tpu_custom_call.1} parent=5 // pred_check
        _
      $region10: #{tpu_custom_call.1} parent=5 // pred_check_branch
        %190 = sbr.rel (%p187) target = $region12
      $region11: #{tpu_custom_call.1} parent=5 // pred_region
        %s191 = ssub.s32 %s15, 1
        // Predicated region
        $region13: #{tpu_custom_call.1} parent=11 // pred_check
          %p192 = pneg %p88
        $region14: #{tpu_custom_call.1} parent=11 // pred_check_branch
          %194 = sbr.rel (%p192) target = $region16
        $region15: #{tpu_custom_call.1} parent=11 // pred_region
          _
        $region16: #{tpu_custom_call.1} parent=11 // pred_fallthru
          _
        // Predicated region
        $region17: #{tpu_custom_call.1} parent=11 // pred_check
          %p195 = pneg %p109
        $region18: #{tpu_custom_call.1} parent=11 // pred_check_branch
          %197 = sbr.rel (%p195) target = $region20
        $region19: #{tpu_custom_call.1} parent=11 // pred_region
          _
        $region20: #{tpu_custom_call.1} parent=11 // pred_fallthru
          _
        // Predicated region
        $region21: #{tpu_custom_call.1} parent=11 // pred_check
          %p198 = pneg %p130
        $region22: #{tpu_custom_call.1} parent=11 // pred_check_branch
          %200 = sbr.rel (%p198) target = $region24
        $region23: #{tpu_custom_call.1} parent=11 // pred_region
          _
        $region24: #{tpu_custom_call.1} parent=11 // pred_fallthru
          _
        // Predicated region
        $region25: #{tpu_custom_call.1} parent=11 // pred_check
          %p201 = pneg %p151
        $region26: #{tpu_custom_call.1} parent=11 // pred_check_branch
          %203 = sbr.rel (%p201) target = $region28
        $region27: #{tpu_custom_call.1} parent=11 // pred_region
          _
        $region28: #{tpu_custom_call.1} parent=11 // pred_fallthru
          _
      $region12: #{tpu_custom_call.1} parent=5 // pred_fallthru
        _
      %p204 = scmp.lt.s32.totalorder %s15, 2
      // Predicated region
      $region29: #{tpu_custom_call.1} parent=5 // pred_check
        %p205 = pneg %p204
      $region30: #{tpu_custom_call.1} parent=5 // pred_check_branch
        %207 = sbr.rel (%p205) target = $region32
      $region31: #{tpu_custom_call.1} parent=5 // pred_region
        // Predicated region
        $region33: #{tpu_custom_call.1} parent=31 // pred_check
          %p208 = pneg %p35
        $region34: #{tpu_custom_call.1} parent=31 // pred_check_branch
          %210 = sbr.rel (%p208) target = $region36
        $region35: #{tpu_custom_call.1} parent=31 // pred_region
          %s211 = smul.u32 13, %s15
          %p212 = scmp.lt.s32.totalorder %s211, 25
          %s213 = scalar_select %p212, %s211, 25
          %s214 = smul.addr %s213, 8
          %s215 = scalar_lea.vmem %s0, %s214
          %s216 = smul.u32 13, %s15
        $region36: #{tpu_custom_call.1} parent=31 // pred_fallthru
          _
        // Predicated region
        $region37: #{tpu_custom_call.1} parent=31 // pred_check
          %p217 = pneg %p61
        $region38: #{tpu_custom_call.1} parent=31 // pred_check_branch
          %219 = sbr.rel (%p217) target = $region40
        $region39: #{tpu_custom_call.1} parent=31 // pred_region
          %s220 = smul.u32 13, %s15
          %p221 = scmp.lt.s32.totalorder %s220, 25
          %s222 = scalar_select %p221, %s220, 25
          %s223 = smul.addr %s222, 8
          %s224 = scalar_lea.vmem %s1, %s223
          %s225 = smul.u32 13, %s15
        $region40: #{tpu_custom_call.1} parent=31 // pred_fallthru
          _
      $region32: #{tpu_custom_call.1} parent=5 // pred_fallthru
        _
      %p226 = scmp.le.s32.totalorder 1, %s15
      %p227 = scmp.lt.s32.totalorder %s15, 3
      %p228 = pnand %p226, %p227
      %p229 = pneg %p228
      // Predicated region
      $region41: #{tpu_custom_call.1} parent=5 // pred_check
        _
      $region42: #{tpu_custom_call.1} parent=5 // pred_check_branch
        %231 = sbr.rel (%p228) target = $region44
      $region43: #{tpu_custom_call.1} parent=5 // pred_region
        %s232 = ssub.s32 %s15, 1
        %s233 = smul.u32 13, %s20
        %p234 = scmp.lt.s32.totalorder %s233, 25
        %s235 = scalar_select %p234, %s233, 25
        %s236 = smul.addr %s235, 8
        %s237 = scalar_lea.vmem %s0, %s236
        %p238 = pneg %p41
        %p239 = pneg %p38
        %s240 = smul.u32 13, %s20
        %p241 = scmp.lt.s32.totalorder %s240, 25
        %s242 = scalar_select %p241, %s240, 25
        %s243 = smul.addr %s242, 8
        %s244 = scalar_lea.vmem %s1, %s243
        %p245 = pneg %p67
        %p246 = pneg %p64
        %p247 = pneg %p88
        %p248 = pneg %p85
        %p249 = pneg %p109
        %p250 = pneg %p106
        %p251 = pneg %p130
        %p252 = pneg %p127
        %p253 = pneg %p151
        %p254 = pneg %p148
        %p255 = pneg %p177
        %p256 = pneg %p174
        %s257 = sand.u32 %s164, 1
        %s258 = scalar_lea.sflag [#allocation3], %s257
        %s259 = sand.u32 %s164, 1
        %s260 = smul.addr %s259, 104
        %s261 = scalar_lea.vmem [#allocation2], %s260
        %s262 = smul.u32 13, %s20
        %p263 = scmp.lt.s32.totalorder %s262, 25
        %s264 = scalar_select %p263, %s262, 25
        %s265 = smul.addr %s264, 8
        %s266 = scalar_lea.vmem %s0, %s265
        %s267 = smul.u32 13, %s20
        %s268 = smul.u32 13, %s20
        %p269 = scmp.lt.s32.totalorder %s268, 25
        %s270 = scalar_select %p269, %s268, 25
        %s271 = smul.addr %s270, 8
        %s272 = scalar_lea.vmem %s1, %s271
        %s273 = smul.u32 13, %s20
        %s274 = smul.u32 13, %s20
        %v275 = vld [vmem:[%s272] sm:$0xff]
        %v276 = vld [vmem:[%s272 + $0x8] sm:$0xff]
        %v277 = vld [vmem:[%s272 + $0x10] sm:$0xff]
        %v278 = vld [vmem:[%s272 + $0x18] sm:$0xff]
        %v279 = vld [vmem:[%s272 + $0x20] sm:$0xff]
        %v280 = vld [vmem:[%s272 + $0x28] sm:$0xff]
        %v281 = vld [vmem:[%s272 + $0x30] sm:$0xff]
        %v282 = vld [vmem:[%s272 + $0x38] sm:$0xff]
        %v283 = vld [vmem:[%s272 + $0x40] sm:$0xff]
        %v284 = vld [vmem:[%s272 + $0x48] sm:$0xff]
        %v285 = vld [vmem:[%s272 + $0x50] sm:$0xff]
        %v286 = vld [vmem:[%s272 + $0x58] sm:$0xff]
        %v287 = vld [vmem:[%s272 + $0x60] sm:$0xff]
        %v288 = vld [vmem:[%s266] sm:$0xff]
        %v289 = vld [vmem:[%s266 + $0x8] sm:$0xff]
        %v290 = vld [vmem:[%s266 + $0x10] sm:$0xff]
        %v291 = vld [vmem:[%s266 + $0x18] sm:$0xff]
        %v292 = vld [vmem:[%s266 + $0x20] sm:$0xff]
        %v293 = vld [vmem:[%s266 + $0x28] sm:$0xff]
        %v294 = vld [vmem:[%s266 + $0x30] sm:$0xff]
        %v295 = vld [vmem:[%s266 + $0x38] sm:$0xff]
        %v296 = vld [vmem:[%s266 + $0x40] sm:$0xff]
        %v297 = vld [vmem:[%s266 + $0x48] sm:$0xff]
        %v298 = vld [vmem:[%s266 + $0x50] sm:$0xff]
        %v299 = vld [vmem:[%s266 + $0x58] sm:$0xff]
        %v300 = vld [vmem:[%s266 + $0x60] sm:$0xff]
        %302 = vset.pattern.permute.xlu0 7
        %303 = vperm.xlu0 %302, %v275
        %v304 = vpop.permute.xlu0 %303
        %307 = vset.pattern.permute.xlu0 7
        %308 = vperm.xlu0 %307, %v276
        %v309 = vpop.permute.xlu0 %308
        %312 = vset.pattern.permute.xlu0 7
        %313 = vperm.xlu0 %312, %v277
        %v314 = vpop.permute.xlu0 %313
        %317 = vset.pattern.permute.xlu0 7
        %318 = vperm.xlu0 %317, %v278
        %v319 = vpop.permute.xlu0 %318
        %322 = vset.pattern.permute.xlu0 7
        %323 = vperm.xlu0 %322, %v279
        %v324 = vpop.permute.xlu0 %323
        %327 = vset.pattern.permute.xlu0 7
        %328 = vperm.xlu0 %327, %v280
        %v329 = vpop.permute.xlu0 %328
        %332 = vset.pattern.permute.xlu0 7
        %333 = vperm.xlu0 %332, %v281
        %v334 = vpop.permute.xlu0 %333
        %337 = vset.pattern.permute.xlu0 7
        %338 = vperm.xlu0 %337, %v282
        %v339 = vpop.permute.xlu0 %338
        %342 = vset.pattern.permute.xlu0 7
        %343 = vperm.xlu0 %342, %v283
        %v344 = vpop.permute.xlu0 %343
        %347 = vset.pattern.permute.xlu0 7
        %348 = vperm.xlu0 %347, %v284
        %v349 = vpop.permute.xlu0 %348
        %352 = vset.pattern.permute.xlu0 7
        %353 = vperm.xlu0 %352, %v285
        %v354 = vpop.permute.xlu0 %353
        %357 = vset.pattern.permute.xlu0 7
        %358 = vperm.xlu0 %357, %v286
        %v359 = vpop.permute.xlu0 %358
        %362 = vset.pattern.permute.xlu0 7
        %363 = vperm.xlu0 %362, %v287
        %v364 = vpop.permute.xlu0 %363
        %v366 = vmul.f32 %v288, %v304
        %v367 = vmul.f32 %v289, %v309
        %v368 = vmul.f32 %v290, %v314
        %v369 = vmul.f32 %v291, %v319
        %v370 = vmul.f32 %v292, %v324
        %v371 = vmul.f32 %v293, %v329
        %v372 = vmul.f32 %v294, %v334
        %v373 = vmul.f32 %v295, %v339
        %v374 = vmul.f32 %v296, %v344
        %v375 = vmul.f32 %v297, %v349
        %v376 = vmul.f32 %v298, %v354
        %v377 = vmul.f32 %v299, %v359
        %v378 = vmul.f32 %v300, %v364
        %v379 = vld [vmem:[%s2] sm:$0xff]
        %v380 = vld [vmem:[%s2 + $0x8] sm:$0xff]
        %v381 = vld [vmem:[%s2 + $0x10] sm:$0x1]
        %v382 = vld [vmem:[%s2 + $0x18] sm:$0x1]
        %vm383 = vcmask 72704
        %v384 = vsel %vm383, %v275, 0
        %v386 = vsel %vm383, %v276, 0
        %v388 = vsel %vm383, %v277, 0
        %v390 = vsel %vm383, %v278, 0
        %v392 = vsel %vm383, %v279, 0
        %v394 = vsel %vm383, %v280, 0
        %v396 = vsel %vm383, %v281, 0
        %v398 = vsel %vm383, %v282, 0
        %v400 = vsel %vm383, %v283, 0
        %v402 = vsel %vm383, %v284, 0
        %v404 = vsel %vm383, %v285, 0
        %v406 = vsel %vm383, %v286, 0
        %v408 = vsel %vm383, %v287, 0
        %vm410 = vcmask 1040384
        %v412 = vsel %vm410, %v381, 0
        %v415 = vsel %vm410, %v382, 0
        %417 = vmatprep.subr.mxu0 %v380
        %418 = vmatpush1.msra.mxu0 %v379
        %419 = vmatprep.subr.mxu0 %v415
        %420 = vmatpush1.msra.mxu0 %v412
        %421 = vmatprep.subr.mxu0 0.0
        %422 = vmatpush1.msra.mxu0 0.0
        %423 = vmatprep.subr.mxu0 0.0
        %424 = vmatpush1.msra.mxu0 0.0
        %425 = vmatprep.subr.mxu0 0.0
        %426 = vmatpush1.msra.mxu0 0.0
        %427 = vmatprep.subr.mxu0 0.0
        %428 = vmatpush1.msra.mxu0 0.0
        %429 = vmatprep.subr.mxu0 0.0
        %430 = vmatpush1.msra.mxu0 0.0
        %431 = vmatprep.subr.mxu0 0.0
        %432 = vmatpush1.msra.mxu0 0.0
        %433 = vmatprep.subr.mxu0 0.0
        %434 = vmatpush1.msra.mxu0 0.0
        %435 = vmatprep.subr.mxu0 0.0
        %436 = vmatpush1.msra.mxu0 0.0
        %437 = vmatprep.subr.mxu0 0.0
        %438 = vmatpush1.msra.mxu0 0.0
        %439 = vmatprep.subr.mxu0 0.0
        %440 = vmatpush1.msra.mxu0 0.0
        %441 = vmatprep.subr.mxu0 0.0
        %442 = vmatpush1.msra.mxu0 0.0
        %443 = vmatprep.subr.mxu0 0.0
        %444 = vmatpush1.msra.mxu0 0.0
        %445 = vmatprep.subr.mxu0 0.0
        %446 = vmatpush1.msra.mxu0 0.0
        %447 = vmatprep.subr.mxu0 0.0
        %448 = vmatpush1.msra.mxu0 0.0
        %449 = vmatprep.subr.mxu0 0.0
        %450 = vmatpush1.msra.mxu0 0.0
        %451 = vmatprep.subr.mxu0 0.0
        %452 = vmatpush1.msra.mxu0 0.0
        %453 = vmatprep.subr.mxu0 0.0
        %454 = vmatpush1.msra.mxu0 0.0
        %455 = vmatprep.subr.mxu0 0.0
        %456 = vmatpush1.msra.mxu0 0.0
        %457 = vmatprep.subr.mxu0 0.0
        %458 = vmatpush1.msra.mxu0 0.0
        %459 = vmatprep.subr.mxu0 0.0
        %460 = vmatpush1.msra.mxu0 0.0
        %461 = vmatprep.subr.mxu0 0.0
        %462 = vmatpush1.msra.mxu0 0.0
        %463 = vmatprep.subr.mxu0 0.0
        %464 = vmatpush1.msra.mxu0 0.0
        %465 = vmatprep.subr.mxu0 0.0
        %466 = vmatpush1.msra.mxu0 0.0
        %467 = vmatprep.subr.mxu0 0.0
        %468 = vmatpush1.msra.mxu0 0.0
        %469 = vmatprep.subr.mxu0 0.0
        %470 = vmatpush1.msra.mxu0 0.0
        %471 = vmatprep.subr.mxu0 0.0
        %472 = vmatpush1.msra.mxu0 0.0
        %473 = vmatprep.subr.mxu0 0.0
        %474 = vmatpush1.msra.mxu0 0.0
        %475 = vmatprep.subr.mxu0 0.0
        %476 = vmatpush1.msra.mxu0 0.0
        %477 = vmatprep.subr.mxu0 0.0
        %478 = vmatpush1.msra.mxu0 0.0
        %479 = vmatprep.subr.mxu0 0.0
        %480 = vmatpush1.msra.mxu0 0.0
        %481 = vmatprep.mubr.f32.mxu0 0.0
        %482 = vmatmul.mubr.f32.gmra.mrb[0].mxu0 %v384
        %v483 = vpop.f32.mrb[0].mxu0
        %v484 = vadd.f32 0.0, %v483
        %v485 = vpop.f32.mrb[0].mxu0
        %v486 = vadd.f32 0.0, %v485
        %487 = vmatprep.mubr.f32.mxu0 0.0
        %488 = vmatmul.mubr.f32.gmra.mrb[0].mxu0 %v386
        %v489 = vpop.f32.mrb[0].mxu0
        %v490 = vadd.f32 0.0, %v489
        %v491 = vpop.f32.mrb[0].mxu0
        %v492 = vadd.f32 0.0, %v491
        %493 = vmatprep.mubr.f32.mxu0 0.0
        %494 = vmatmul.mubr.f32.gmra.mrb[0].mxu0 %v388
        %v495 = vpop.f32.mrb[0].mxu0
        %v496 = vadd.f32 0.0, %v495
        %v497 = vpop.f32.mrb[0].mxu0
        %v498 = vadd.f32 0.0, %v497
        %499 = vmatprep.mubr.f32.mxu0 0.0
        %500 = vmatmul.mubr.f32.gmra.mrb[0].mxu0 %v390
        %v501 = vpop.f32.mrb[0].mxu0
        %v502 = vadd.f32 0.0, %v501
        %v503 = vpop.f32.mrb[0].mxu0
        %v504 = vadd.f32 0.0, %v503
        %505 = vmatprep.mubr.f32.mxu0 0.0
        %506 = vmatmul.mubr.f32.gmra.mrb[0].mxu0 %v392
        %v507 = vpop.f32.mrb[0].mxu0
        %v508 = vadd.f32 0.0, %v507
        %v509 = vpop.f32.mrb[0].mxu0
        %v510 = vadd.f32 0.0, %v509
        %511 = vmatprep.mubr.f32.mxu0 0.0
        %512 = vmatmul.mubr.f32.gmra.mrb[0].mxu0 %v394
        %v513 = vpop.f32.mrb[0].mxu0
        %v514 = vadd.f32 0.0, %v513
        %v515 = vpop.f32.mrb[0].mxu0
        %v516 = vadd.f32 0.0, %v515
        %517 = vmatprep.mubr.f32.mxu0 0.0
        %518 = vmatmul.mubr.f32.gmra.mrb[0].mxu0 %v396
        %v519 = vpop.f32.mrb[0].mxu0
        %v520 = vadd.f32 0.0, %v519
        %v521 = vpop.f32.mrb[0].mxu0
        %v522 = vadd.f32 0.0, %v521
        %523 = vmatprep.mubr.f32.mxu0 0.0
        %524 = vmatmul.mubr.f32.gmra.mrb[0].mxu0 %v398
        %v525 = vpop.f32.mrb[0].mxu0
        %v526 = vadd.f32 0.0, %v525
        %v527 = vpop.f32.mrb[0].mxu0
        %v528 = vadd.f32 0.0, %v527
        %529 = vmatprep.mubr.f32.mxu0 0.0
        %530 = vmatmul.mubr.f32.gmra.mrb[0].mxu0 %v400
        %v531 = vpop.f32.mrb[0].mxu0
        %v532 = vadd.f32 0.0, %v531
        %v533 = vpop.f32.mrb[0].mxu0
        %v534 = vadd.f32 0.0, %v533
        %535 = vmatprep.mubr.f32.mxu0 0.0
        %536 = vmatmul.mubr.f32.gmra.mrb[0].mxu0 %v402
        %v537 = vpop.f32.mrb[0].mxu0
        %v538 = vadd.f32 0.0, %v537
        %v539 = vpop.f32.mrb[0].mxu0
        %v540 = vadd.f32 0.0, %v539
        %541 = vmatprep.mubr.f32.mxu0 0.0
        %542 = vmatmul.mubr.f32.gmra.mrb[0].mxu0 %v404
        %v543 = vpop.f32.mrb[0].mxu0
        %v544 = vadd.f32 0.0, %v543
        %v545 = vpop.f32.mrb[0].mxu0
        %v546 = vadd.f32 0.0, %v545
        %547 = vmatprep.mubr.f32.mxu0 0.0
        %548 = vmatmul.mubr.f32.gmra.mrb[0].mxu0 %v406
        %v549 = vpop.f32.mrb[0].mxu0
        %v550 = vadd.f32 0.0, %v549
        %v551 = vpop.f32.mrb[0].mxu0
        %v552 = vadd.f32 0.0, %v551
        %553 = vmatprep.mubr.f32.mxu0 0.0
        %554 = vmatmul.mubr.f32.gmra.mrb[0].mxu0 %v408
        %v555 = vpop.f32.mrb[0].mxu0
        %v556 = vadd.f32 0.0, %v555
        %v557 = vpop.f32.mrb[0].mxu0
        %v558 = vadd.f32 0.0, %v557
        %559 = vdwg.mxu0
        %v560 = vld [vmem:[%s3] sm:$0xff]
        %v561 = vld [vmem:[%s3 + $0x8] sm:$0xff]
        %v562 = vld [vmem:[%s3 + $0x10] sm:$0xff]
        %v563 = vld [vmem:[%s3 + $0x18] sm:$0xff]
        %vm564 = vcmask 130048
        %v566 = vsel %vm564, %v366, 0
        %v569 = vsel %vm564, %v367, 0
        %v572 = vsel %vm564, %v368, 0
        %v575 = vsel %vm564, %v369, 0
        %v578 = vsel %vm564, %v370, 0
        %v581 = vsel %vm564, %v371, 0
        %v584 = vsel %vm564, %v372, 0
        %v587 = vsel %vm564, %v373, 0
        %v590 = vsel %vm564, %v374, 0
        %v593 = vsel %vm564, %v375, 0
        %v596 = vsel %vm564, %v376, 0
        %v599 = vsel %vm564, %v377, 0
        %v602 = vsel %vm564, %v378, 0
        %604 = vmatprep.subr.mxu0 %v561
        %605 = vmatpush1.msra.mxu0 %v560
        %606 = vmatprep.subr.mxu0 %v563
        %607 = vmatpush1.msra.mxu0 %v562
        %608 = vmatprep.subr.mxu0 0.0
        %609 = vmatpush1.msra.mxu0 0.0
        %610 = vmatprep.subr.mxu0 0.0
        %611 = vmatpush1.msra.mxu0 0.0
        %612 = vmatprep.subr.mxu0 0.0
        %613 = vmatpush1.msra.mxu0 0.0
        %614 = vmatprep.subr.mxu0 0.0
        %615 = vmatpush1.msra.mxu0 0.0
        %616 = vmatprep.subr.mxu0 0.0
        %617 = vmatpush1.msra.mxu0 0.0
        %618 = vmatprep.subr.mxu0 0.0
        %619 = vmatpush1.msra.mxu0 0.0
        %620 = vmatprep.subr.mxu0 0.0
        %621 = vmatpush1.msra.mxu0 0.0
        %622 = vmatprep.subr.mxu0 0.0
        %623 = vmatpush1.msra.mxu0 0.0
        %624 = vmatprep.subr.mxu0 0.0
        %625 = vmatpush1.msra.mxu0 0.0
        %626 = vmatprep.subr.mxu0 0.0
        %627 = vmatpush1.msra.mxu0 0.0
        %628 = vmatprep.subr.mxu0 0.0
        %629 = vmatpush1.msra.mxu0 0.0
        %630 = vmatprep.subr.mxu0 0.0
        %631 = vmatpush1.msra.mxu0 0.0
        %632 = vmatprep.subr.mxu0 0.0
        %633 = vmatpush1.msra.mxu0 0.0
        %634 = vmatprep.subr.mxu0 0.0
        %635 = vmatpush1.msra.mxu0 0.0
        %636 = vmatprep.subr.mxu0 0.0
        %637 = vmatpush1.msra.mxu0 0.0
        %638 = vmatprep.subr.mxu0 0.0
        %639 = vmatpush1.msra.mxu0 0.0
        %640 = vmatprep.subr.mxu0 0.0
        %641 = vmatpush1.msra.mxu0 0.0
        %642 = vmatprep.subr.mxu0 0.0
        %643 = vmatpush1.msra.mxu0 0.0
        %644 = vmatprep.subr.mxu0 0.0
        %645 = vmatpush1.msra.mxu0 0.0
        %646 = vmatprep.subr.mxu0 0.0
        %647 = vmatpush1.msra.mxu0 0.0
        %648 = vmatprep.subr.mxu0 0.0
        %649 = vmatpush1.msra.mxu0 0.0
        %650 = vmatprep.subr.mxu0 0.0
        %651 = vmatpush1.msra.mxu0 0.0
        %652 = vmatprep.subr.mxu0 0.0
        %653 = vmatpush1.msra.mxu0 0.0
        %654 = vmatprep.subr.mxu0 0.0
        %655 = vmatpush1.msra.mxu0 0.0
        %656 = vmatprep.subr.mxu0 0.0
        %657 = vmatpush1.msra.mxu0 0.0
        %658 = vmatprep.subr.mxu0 0.0
        %659 = vmatpush1.msra.mxu0 0.0
        %660 = vmatprep.subr.mxu0 0.0
        %661 = vmatpush1.msra.mxu0 0.0
        %662 = vmatprep.subr.mxu0 0.0
        %663 = vmatpush1.msra.mxu0 0.0
        %664 = vmatprep.subr.mxu0 0.0
        %665 = vmatpush1.msra.mxu0 0.0
        %666 = vmatprep.subr.mxu0 0.0
        %667 = vmatpush1.msra.mxu0 0.0
        %668 = vmatprep.mubr.f32.mxu0 0.0
        %669 = vmatmul.mubr.f32.gmra.mrb[0].mxu0 %v566
        %v670 = vpop.f32.mrb[0].mxu0
        %v671 = vadd.f32 0.0, %v670
        %v672 = vpop.f32.mrb[0].mxu0
        %v673 = vadd.f32 0.0, %v672
        %674 = vmatprep.mubr.f32.mxu0 0.0
        %675 = vmatmul.mubr.f32.gmra.mrb[0].mxu0 %v569
        %v676 = vpop.f32.mrb[0].mxu0
        %v677 = vadd.f32 0.0, %v676
        %v678 = vpop.f32.mrb[0].mxu0
        %v679 = vadd.f32 0.0, %v678
        %680 = vmatprep.mubr.f32.mxu0 0.0
        %681 = vmatmul.mubr.f32.gmra.mrb[0].mxu0 %v572
        %v682 = vpop.f32.mrb[0].mxu0
        %v683 = vadd.f32 0.0, %v682
        %v684 = vpop.f32.mrb[0].mxu0
        %v685 = vadd.f32 0.0, %v684
        %686 = vmatprep.mubr.f32.mxu0 0.0
        %687 = vmatmul.mubr.f32.gmra.mrb[0].mxu0 %v575
        %v688 = vpop.f32.mrb[0].mxu0
        %v689 = vadd.f32 0.0, %v688
        %v690 = vpop.f32.mrb[0].mxu0
        %v691 = vadd.f32 0.0, %v690
        %692 = vmatprep.mubr.f32.mxu0 0.0
        %693 = vmatmul.mubr.f32.gmra.mrb[0].mxu0 %v578
        %v694 = vpop.f32.mrb[0].mxu0
        %v695 = vadd.f32 0.0, %v694
        %v696 = vpop.f32.mrb[0].mxu0
        %v697 = vadd.f32 0.0, %v696
        %698 = vmatprep.mubr.f32.mxu0 0.0
        %699 = vmatmul.mubr.f32.gmra.mrb[0].mxu0 %v581
        %v700 = vpop.f32.mrb[0].mxu0
        %v701 = vadd.f32 0.0, %v700
        %v702 = vpop.f32.mrb[0].mxu0
        %v703 = vadd.f32 0.0, %v702
        %704 = vmatprep.mubr.f32.mxu0 0.0
        %705 = vmatmul.mubr.f32.gmra.mrb[0].mxu0 %v584
        %v706 = vpop.f32.mrb[0].mxu0
        %v707 = vadd.f32 0.0, %v706
        %v708 = vpop.f32.mrb[0].mxu0
        %v709 = vadd.f32 0.0, %v708
        %710 = vmatprep.mubr.f32.mxu0 0.0
        %711 = vmatmul.mubr.f32.gmra.mrb[0].mxu0 %v587
        %v712 = vpop.f32.mrb[0].mxu0
        %v713 = vadd.f32 0.0, %v712
        %v714 = vpop.f32.mrb[0].mxu0
        %v715 = vadd.f32 0.0, %v714
        %716 = vmatprep.mubr.f32.mxu0 0.0
        %717 = vmatmul.mubr.f32.gmra.mrb[0].mxu0 %v590
        %v718 = vpop.f32.mrb[0].mxu0
        %v719 = vadd.f32 0.0, %v718
        %v720 = vpop.f32.mrb[0].mxu0
        %v721 = vadd.f32 0.0, %v720
        %722 = vmatprep.mubr.f32.mxu0 0.0
        %723 = vmatmul.mubr.f32.gmra.mrb[0].mxu0 %v593
        %v724 = vpop.f32.mrb[0].mxu0
        %v725 = vadd.f32 0.0, %v724
        %v726 = vpop.f32.mrb[0].mxu0
        %v727 = vadd.f32 0.0, %v726
        %728 = vmatprep.mubr.f32.mxu0 0.0
        %729 = vmatmul.mubr.f32.gmra.mrb[0].mxu0 %v596
        %v730 = vpop.f32.mrb[0].mxu0
        %v731 = vadd.f32 0.0, %v730
        %v732 = vpop.f32.mrb[0].mxu0
        %v733 = vadd.f32 0.0, %v732
        %734 = vmatprep.mubr.f32.mxu0 0.0
        %735 = vmatmul.mubr.f32.gmra.mrb[0].mxu0 %v599
        %v736 = vpop.f32.mrb[0].mxu0
        %v737 = vadd.f32 0.0, %v736
        %v738 = vpop.f32.mrb[0].mxu0
        %v739 = vadd.f32 0.0, %v738
        %740 = vmatprep.mubr.f32.mxu0 0.0
        %741 = vmatmul.mubr.f32.gmra.mrb[0].mxu0 %v602
        %v742 = vpop.f32.mrb[0].mxu0
        %v743 = vadd.f32 0.0, %v742
        %v744 = vpop.f32.mrb[0].mxu0
        %v745 = vadd.f32 0.0, %v744
        %746 = vdwg.mxu0
        %v747 = vmul.f32 %v484, %v671
        %v748 = vmul.f32 %v486, %v673
        %v749 = vmul.f32 %v490, %v677
        %v750 = vmul.f32 %v492, %v679
        %v751 = vmul.f32 %v496, %v683
        %v752 = vmul.f32 %v498, %v685
        %v753 = vmul.f32 %v502, %v689
        %v754 = vmul.f32 %v504, %v691
        %v755 = vmul.f32 %v508, %v695
        %v756 = vmul.f32 %v510, %v697
        %v757 = vmul.f32 %v514, %v701
        %v758 = vmul.f32 %v516, %v703
        %v759 = vmul.f32 %v520, %v707
        %v760 = vmul.f32 %v522, %v709
        %v761 = vmul.f32 %v526, %v713
        %v762 = vmul.f32 %v528, %v715
        %v763 = vmul.f32 %v532, %v719
        %v764 = vmul.f32 %v534, %v721
        %v765 = vmul.f32 %v538, %v725
        %v766 = vmul.f32 %v540, %v727
        %v767 = vmul.f32 %v544, %v731
        %v768 = vmul.f32 %v546, %v733
        %v769 = vmul.f32 %v550, %v737
        %v770 = vmul.f32 %v552, %v739
        %v771 = vmul.f32 %v556, %v743
        %v772 = vmul.f32 %v558, %v745
        %v773 = vld [vmem:[%s4] sm:$0xff]
        %v774 = vld [vmem:[%s4 + $0x8] sm:$0xff]
        %v775 = vld [vmem:[%s4 + $0x10] sm:$0xff]
        %v776 = vld [vmem:[%s4 + $0x18] sm:$0xff]
        %v777 = vld [vmem:[%s4 + $0x20] sm:$0xff]
        %v778 = vld [vmem:[%s4 + $0x28] sm:$0xff]
        %v779 = vld [vmem:[%s4 + $0x30] sm:$0xff]
        %v780 = vld [vmem:[%s4 + $0x38] sm:$0xff]
        %v781 = vld [vmem:[%s4 + $0x40] sm:$0xff]
        %v782 = vld [vmem:[%s4 + $0x48] sm:$0xff]
        %v783 = vld [vmem:[%s4 + $0x50] sm:$0xff]
        %v784 = vld [vmem:[%s4 + $0x58] sm:$0xff]
        %v785 = vld [vmem:[%s4 + $0x60] sm:$0xff]
        %v786 = vld [vmem:[%s4 + $0x68] sm:$0xff]
        %v787 = vld [vmem:[%s4 + $0x70] sm:$0xff]
        %v788 = vld [vmem:[%s4 + $0x78] sm:$0xff]
        %v789 = vld [vmem:[%s4 + $0x80] sm:$0xff]
        %v790 = vld [vmem:[%s4 + $0x88] sm:$0xff]
        %v791 = vld [vmem:[%s5] sm:$0x1]
        %v793 = vlaneseq
        %v794 = vshrl.u32 %v793, 7
        %v795 = vsub.s32 0, %v794
        %v796 = vrot.slane %v791, %v795
        %v799 = vsel %vm564, %v748, 0
        %v802 = vsel %vm564, %v750, 0
        %v805 = vsel %vm564, %v752, 0
        %v808 = vsel %vm564, %v754, 0
        %v811 = vsel %vm564, %v756, 0
        %v814 = vsel %vm564, %v758, 0
        %v817 = vsel %vm564, %v760, 0
        %v820 = vsel %vm564, %v762, 0
        %v823 = vsel %vm564, %v764, 0
        %v826 = vsel %vm564, %v766, 0
        %v829 = vsel %vm564, %v768, 0
        %v832 = vsel %vm564, %v770, 0
        %v835 = vsel %vm564, %v772, 0
        %837 = vmatprep.subr.mxu0 0.0
        %838 = vmatpush1.msra.mxu0 %v773
        %839 = vmatprep.subr.mxu0 0.0
        %840 = vmatpush1.msra.mxu0 %v774
        %841 = vmatprep.subr.mxu0 0.0
        %842 = vmatpush1.msra.mxu0 %v775
        %843 = vmatprep.subr.mxu0 0.0
        %844 = vmatpush1.msra.mxu0 %v776
        %845 = vmatprep.subr.mxu0 0.0
        %846 = vmatpush1.msra.mxu0 %v777
        %847 = vmatprep.subr.mxu0 0.0
        %848 = vmatpush1.msra.mxu0 %v778
        %849 = vmatprep.subr.mxu0 0.0
        %850 = vmatpush1.msra.mxu0 %v779
        %851 = vmatprep.subr.mxu0 0.0
        %852 = vmatpush1.msra.mxu0 %v780
        %853 = vmatprep.subr.mxu0 0.0
        %854 = vmatpush1.msra.mxu0 %v781
        %855 = vmatprep.subr.mxu0 0.0
        %856 = vmatpush1.msra.mxu0 %v782
        %857 = vmatprep.subr.mxu0 0.0
        %858 = vmatpush1.msra.mxu0 %v783
        %859 = vmatprep.subr.mxu0 0.0
        %860 = vmatpush1.msra.mxu0 %v784
        %861 = vmatprep.subr.mxu0 0.0
        %862 = vmatpush1.msra.mxu0 %v785
        %863 = vmatprep.subr.mxu0 0.0
        %864 = vmatpush1.msra.mxu0 %v786
        %865 = vmatprep.subr.mxu0 0.0
        %866 = vmatpush1.msra.mxu0 %v787
        %867 = vmatprep.subr.mxu0 0.0
        %868 = vmatpush1.msra.mxu0 %v788
        %869 = vmatprep.subr.mxu0 0.0
        %870 = vmatpush1.msra.mxu0 %v789
        %871 = vmatprep.subr.mxu0 0.0
        %872 = vmatpush1.msra.mxu0 %v790
        %873 = vmatprep.subr.mxu0 0.0
        %874 = vmatpush1.msra.mxu0 0.0
        %875 = vmatprep.subr.mxu0 0.0
        %876 = vmatpush1.msra.mxu0 0.0
        %877 = vmatprep.subr.mxu0 0.0
        %878 = vmatpush1.msra.mxu0 0.0
        %879 = vmatprep.subr.mxu0 0.0
        %880 = vmatpush1.msra.mxu0 0.0
        %881 = vmatprep.subr.mxu0 0.0
        %882 = vmatpush1.msra.mxu0 0.0
        %883 = vmatprep.subr.mxu0 0.0
        %884 = vmatpush1.msra.mxu0 0.0
        %885 = vmatprep.subr.mxu0 0.0
        %886 = vmatpush1.msra.mxu0 0.0
        %887 = vmatprep.subr.mxu0 0.0
        %888 = vmatpush1.msra.mxu0 0.0
        %889 = vmatprep.subr.mxu0 0.0
        %890 = vmatpush1.msra.mxu0 0.0
        %891 = vmatprep.subr.mxu0 0.0
        %892 = vmatpush1.msra.mxu0 0.0
        %893 = vmatprep.subr.mxu0 0.0
        %894 = vmatpush1.msra.mxu0 0.0
        %895 = vmatprep.subr.mxu0 0.0
        %896 = vmatpush1.msra.mxu0 0.0
        %897 = vmatprep.subr.mxu0 0.0
        %898 = vmatpush1.msra.mxu0 0.0
        %899 = vmatprep.subr.mxu0 0.0
        %900 = vmatpush1.msra.mxu0 0.0
        %901 = vmatprep.mubr.f32.mxu0 %v799
        %902 = vmatmul.mubr.f32.gmra.mrb[0].mxu0 %v747
        %v903 = vpop.f32.mrb[0].mxu0
        %v904 = vadd.f32 %v796, %v903
        %v905 = vpop.f32.mrb[0].mxu0
        %906 = vmatprep.mubr.f32.mxu0 %v802
        %907 = vmatmul.mubr.f32.gmra.mrb[0].mxu0 %v749
        %v908 = vpop.f32.mrb[0].mxu0
        %v909 = vadd.f32 %v796, %v908
        %v910 = vpop.f32.mrb[0].mxu0
        %911 = vmatprep.mubr.f32.mxu0 %v805
        %912 = vmatmul.mubr.f32.gmra.mrb[0].mxu0 %v751
        %v913 = vpop.f32.mrb[0].mxu0
        %v914 = vadd.f32 %v796, %v913
        %v915 = vpop.f32.mrb[0].mxu0
        %916 = vmatprep.mubr.f32.mxu0 %v808
        %917 = vmatmul.mubr.f32.gmra.mrb[0].mxu0 %v753
        %v918 = vpop.f32.mrb[0].mxu0
        %v919 = vadd.f32 %v796, %v918
        %v920 = vpop.f32.mrb[0].mxu0
        %921 = vmatprep.mubr.f32.mxu0 %v811
        %922 = vmatmul.mubr.f32.gmra.mrb[0].mxu0 %v755
        %v923 = vpop.f32.mrb[0].mxu0
        %v924 = vadd.f32 %v796, %v923
        %v925 = vpop.f32.mrb[0].mxu0
        %926 = vmatprep.mubr.f32.mxu0 %v814
        %927 = vmatmul.mubr.f32.gmra.mrb[0].mxu0 %v757
        %v928 = vpop.f32.mrb[0].mxu0
        %v929 = vadd.f32 %v796, %v928
        %v930 = vpop.f32.mrb[0].mxu0
        %931 = vmatprep.mubr.f32.mxu0 %v817
        %932 = vmatmul.mubr.f32.gmra.mrb[0].mxu0 %v759
        %v933 = vpop.f32.mrb[0].mxu0
        %v934 = vadd.f32 %v796, %v933
        %v935 = vpop.f32.mrb[0].mxu0
        %936 = vmatprep.mubr.f32.mxu0 %v820
        %937 = vmatmul.mubr.f32.gmra.mrb[0].mxu0 %v761
        %v938 = vpop.f32.mrb[0].mxu0
        %v939 = vadd.f32 %v796, %v938
        %v940 = vpop.f32.mrb[0].mxu0
        %941 = vmatprep.mubr.f32.mxu0 %v823
        %942 = vmatmul.mubr.f32.gmra.mrb[0].mxu0 %v763
        %v943 = vpop.f32.mrb[0].mxu0
        %v944 = vadd.f32 %v796, %v943
        %v945 = vpop.f32.mrb[0].mxu0
        %946 = vmatprep.mubr.f32.mxu0 %v826
        %947 = vmatmul.mubr.f32.gmra.mrb[0].mxu0 %v765
        %v948 = vpop.f32.mrb[0].mxu0
        %v949 = vadd.f32 %v796, %v948
        %v950 = vpop.f32.mrb[0].mxu0
        %951 = vmatprep.mubr.f32.mxu0 %v829
        %952 = vmatmul.mubr.f32.gmra.mrb[0].mxu0 %v767
        %v953 = vpop.f32.mrb[0].mxu0
        %v954 = vadd.f32 %v796, %v953
        %v955 = vpop.f32.mrb[0].mxu0
        %956 = vmatprep.mubr.f32.mxu0 %v832
        %957 = vmatmul.mubr.f32.gmra.mrb[0].mxu0 %v769
        %v958 = vpop.f32.mrb[0].mxu0
        %v959 = vadd.f32 %v796, %v958
        %v960 = vpop.f32.mrb[0].mxu0
        %961 = vmatprep.mubr.f32.mxu0 %v835
        %962 = vmatmul.mubr.f32.gmra.mrb[0].mxu0 %v771
        %v963 = vpop.f32.mrb[0].mxu0
        %v964 = vadd.f32 %v796, %v963
        %v965 = vpop.f32.mrb[0].mxu0
        %966 = vdwg.mxu0
        %967 = vst [vmem:[%s261] sm:$0xff] %v904
        %968 = vst [vmem:[%s261 + $0x8] sm:$0xff] %v909
        %969 = vst [vmem:[%s261 + $0x10] sm:$0xff] %v914
        %970 = vst [vmem:[%s261 + $0x18] sm:$0xff] %v919
        %971 = vst [vmem:[%s261 + $0x20] sm:$0xff] %v924
        %972 = vst [vmem:[%s261 + $0x28] sm:$0xff] %v929
        %973 = vst [vmem:[%s261 + $0x30] sm:$0xff] %v934
        %974 = vst [vmem:[%s261 + $0x38] sm:$0xff] %v939
        %975 = vst [vmem:[%s261 + $0x40] sm:$0xff] %v944
        %976 = vst [vmem:[%s261 + $0x48] sm:$0xff] %v949
        %977 = vst [vmem:[%s261 + $0x50] sm:$0xff] %v954
        %978 = vst [vmem:[%s261 + $0x58] sm:$0xff] %v959
        %979 = vst [vmem:[%s261 + $0x60] sm:$0xff] %v964
        %s980 = sand.u32 %s164, 1
        %s981 = scalar_lea.sflag [#allocation3], %s980
        %s982 = sand.u32 %s164, 1
        %s983 = smul.addr %s982, 104
        %s984 = scalar_lea.vmem [#allocation2], %s983
        // Predicated region
        $region45: #{tpu_custom_call.1} parent=43 // pred_check
          %p985 = pneg %p174
        $region46: #{tpu_custom_call.1} parent=43 // pred_check_branch
          %987 = sbr.rel (%p985) target = $region48
        $region47: #{tpu_custom_call.1} parent=43 // pred_region
          %s988 = smul.u32 13, %s20
          %s990 = ssub.s32 1664, 1664
          %991 = vsyncadd %s981, %s990
          %s992 = smul.addr %s988, 128
          %s993 = scalar_lea.hbm %s6, %s992
          %s994 = sshll.u32 %s984, 4
          %s995 = int_to_ptr.vmem [resolvable:$true] %s994
          %1000 = dma.vmem_to_hbm [thread:$0]  %s995, 1664, %s993, %s981, 128, 128, 8
        $region48: #{tpu_custom_call.1} parent=43 // pred_fallthru
          _
      $region44: #{tpu_custom_call.1} parent=5 // pred_fallthru
        _
      %p1001 = scmp.le.s32.totalorder 2, %s15
      // Predicated region
      $region49: #{tpu_custom_call.1} parent=5 // pred_check
        %p1002 = pneg %p1001
      $region50: #{tpu_custom_call.1} parent=5 // pred_check_branch
        %1004 = sbr.rel (%p1002) target = $region52
      $region51: #{tpu_custom_call.1} parent=5 // pred_region
        %s1005 = ssub.s32 %s15, 2
        // Predicated region
        $region53: #{tpu_custom_call.1} parent=51 // pred_check
          %p1006 = pneg %p180
        $region54: #{tpu_custom_call.1} parent=51 // pred_check_branch
          %1008 = sbr.rel (%p1006) target = $region56
        $region55: #{tpu_custom_call.1} parent=51 // pred_region
          %s1009 = sand.u32 %s165, 1
          %s1010 = scalar_lea.sflag [#allocation3], %s1009
          %s1011 = sand.u32 %s165, 1
          %s1012 = smul.addr %s1011, 104
          %s1013 = scalar_lea.vmem [#allocation2], %s1012
          %1014 = dma.done %s1010, 1664
        $region56: #{tpu_custom_call.1} parent=51 // pred_fallthru
          _
      $region52: #{tpu_custom_call.1} parent=5 // pred_fallthru
        _
    $region6: #{tpu_custom_call.1} parent=1 // loop_footer
      %s19 = sadd.s32 1, %s15
    $region7: #{tpu_custom_call.1} parent=1 // loop_footer_branch
      %14 = sbr.rel target = $region3
    $region8: #{tpu_custom_call.1} parent=1 // loop_exit
      _
    %1015 = vsyncpa [#allocation3], 1
    %s1016 = scalar_lea.sflag [#allocation3], 1
    %1017 = vsyncpa %s1016, 1

</llo_original>
